<compile_context>
chip_gen: v5e
topology: v5e:2x2
jax: 0.10.0
libtpu: 0.0.40
codegen_flags: <defaults>
</compile_context>

<pallas_src>
import functools

import jax
import jax.numpy as jnp
from jax.experimental import pallas as pl
from jax.experimental.pallas import tpu as pltpu


def _partial_sumsq_kernel(x_ref, y_ref, out_ref):
    # x_ref  : (4*tg, D)  rows of bn_features (native dtype, sublane-dense)
    # y_ref  : (tg, D)    one bn_features2 row per group (zeros for the tail)
    # out_ref: (1, 1, D)  f32 partial sum of squares for this block
    tg = y_ref.shape[0]
    y = y_ref[...].astype(jnp.float32)
    acc = None
    for k in range(4):
        # Rows k, k+4, k+8, ... all pair with y[group]; the stride-4 sublane
        # read does the group broadcast without any reshape / relayout.
        xk = x_ref[pl.ds(k, tg, stride=4), :].astype(jnp.float32)
        d = xk - y
        acc = d * d if acc is None else acc + d * d
    # Finish the block reduction here (sublane reduce on the XLU); only a
    # lane-dense (1, 1, D) partial goes back to HBM.
    out_ref[...] = jnp.sum(acc, axis=0)[None, None, :]


def _pick_group_tile(n_groups, d, x_itemsize, y_itemsize, max_block_bytes):
    """Largest multiple-of-8 group tile that divides n_groups and whose
    streamed (x + y) block footprint stays under max_block_bytes.  Prefers a
    tile yielding >= 2 grid blocks (v7x megacore sharding).  Falls back to
    the full extent (always a legal block shape)."""
    lanes = ((d + 127) // 128) * 128                       # lane padding
    per_group_bytes = 4 * lanes * x_itemsize + lanes * y_itemsize
    tg_budget = max(8, max_block_bytes // per_group_bytes)

    cands = [c for c in range(8, min(n_groups, tg_budget) + 1, 8)
             if n_groups % c == 0]
    if cands:
        two_plus = [c for c in cands if c <= n_groups // 2]
        return two_plus[-1] if two_plus else cands[-1]
    # TODO(synk): for very large n_groups with no multiple-of-8 divisor this
    # single full-extent block can exceed the VMEM budget; a tail-masked or
    # two-call remainder path would be needed for such pathological shapes.
    return n_groups


@functools.partial(jax.jit, static_argnames=("max_block_bytes",))
def reasoning_loss(bn_features, bn_features2, *, max_block_bytes=8 * 1024 * 1024):
    B, D = bn_features.shape
    B2, D2 = bn_features2.shape
    assert D2 == D
    # TODO(synk): B % 4 != 0 (ragged last group, handled by slice clamping in
    # the PyTorch original) is not supported by this kernel path.
    assert B % 4 == 0

    n_groups = B // 4
    take = min(B2 // 4, n_groups)

    # Small per-group rhs, kept in its NATIVE dtype (cast happens on load in
    # the kernel).  A zero row reproduces the untouched rows of `new`.
    if take == n_groups:
        y_small = bn_features2[:take]
    elif take == 0:
        y_small = jnp.zeros((n_groups, D), bn_features2.dtype)
    else:
        y_small = jnp.concatenate(
            [bn_features2[:take],
             jnp.zeros((n_groups - take, D), bn_features2.dtype)], axis=0)

    tg = _pick_group_tile(
        n_groups, D,
        jnp.dtype(bn_features.dtype).itemsize,
        jnp.dtype(bn_features2.dtype).itemsize,
        max_block_bytes)
    nb = n_groups // tg

    partials = pl.pallas_call(
        _partial_sumsq_kernel,
        out_shape=jax.ShapeDtypeStruct((nb, 1, D), jnp.float32),
        grid_spec=pltpu.PrefetchScalarGridSpec(
            num_scalar_prefetch=0,
            grid=(nb,),
            in_specs=[
                pl.BlockSpec((4 * tg, D), lambda i: (i, 0)),   # bn_features, 2D stream
                pl.BlockSpec((tg, D), lambda i: (i, 0)),        # per-group rhs
            ],
            out_specs=pl.BlockSpec((1, 1, D), lambda i: (i, 0, 0)),
        ),
        compiler_params=pltpu.CompilerParams(
            dimension_semantics=("parallel",),
            vmem_limit_bytes=32 * 1024 * 1024,
        ),
    )(bn_features, y_small)

    # Tiny epilogue: reduce the (nb, 1, D) partials slab and take the sqrt.
    return jnp.sqrt(jnp.sum(partials))


if __name__ == "__main__":
    key = jax.random.PRNGKey(0)
    k1, k2 = jax.random.split(key)

    B, D = 16, 32          # batch (multiple of 4), feature dim
    B2 = 16                # bn_features2 batch; only first B2//4 rows are used

    bn_features = jax.random.normal(k1, (B, D), dtype=jnp.float32)
    bn_features2 = jax.random.normal(k2, (B2, D), dtype=jnp.float32)

    loss = jax.block_until_ready(reasoning_loss(bn_features, bn_features2))

    # pure-JAX reference of the PyTorch forward
    g = B2 // 4
    new2 = jnp.zeros_like(bn_features)
    new2 = new2.at[: 4 * g].set(jnp.repeat(bn_features2[:g], 4, axis=0))
    ref = jnp.sqrt(jnp.sum((bn_features - new2) ** 2))

    assert jnp.allclose(loss, ref, rtol=1e-5, atol=1e-5), (loss, ref)
    print("KERNEL_OK")
</pallas_src>

<mosaic_0001>
module attributes {stable_mosaic.version = 11 : i64} {
  func.func @_partial_sumsq_kernel(%arg0: i32, %arg1: memref<16x32xf32, #tpu.memory_space<vmem>>, %arg2: memref<4x32xf32, #tpu.memory_space<vmem>>, %arg3: memref<1x1x32xf32, #tpu.memory_space<vmem>>) attributes {dimension_semantics = [#tpu.dimension_semantics<parallel>], iteration_bounds = array<i64: 1>, scalar_prefetch = 0 : i64, scratch_operands = 0 : i64, tpu.core_type = #tpu.core_type<tc>, window_params = [{transform_indices = @transform_0, window_bounds = array<i64: 16, 32>}, {transform_indices = @transform_1, window_bounds = array<i64: 4, 32>}, {transform_indices = @transform_2, window_bounds = array<i64: 1, 1, 32>}]} {
    %c0 = arith.constant 0 : index
    %c0_0 = arith.constant 0 : index
    %0 = vector.load %arg2[%c0, %c0_0] : memref<4x32xf32, #tpu.memory_space<vmem>>, vector<4x32xf32>
    %c0_1 = arith.constant 0 : index
    %c0_2 = arith.constant 0 : index
    %1 = tpu.strided_load %arg1[%c0_1, %c0_2] {strides = array<i32: 4, 1>} : memref<16x32xf32, #tpu.memory_space<vmem>>, vector<4x32xf32>
    %2 = arith.subf %1, %0 : vector<4x32xf32>
    %3 = arith.mulf %2, %2 : vector<4x32xf32>
    %c1 = arith.constant 1 : index
    %c0_3 = arith.constant 0 : index
    %4 = tpu.strided_load %arg1[%c1, %c0_3] {strides = array<i32: 4, 1>} : memref<16x32xf32, #tpu.memory_space<vmem>>, vector<4x32xf32>
    %5 = arith.subf %4, %0 : vector<4x32xf32>
    %6 = arith.mulf %5, %5 : vector<4x32xf32>
    %7 = arith.addf %3, %6 : vector<4x32xf32>
    %c2 = arith.constant 2 : index
    %c0_4 = arith.constant 0 : index
    %8 = tpu.strided_load %arg1[%c2, %c0_4] {strides = array<i32: 4, 1>} : memref<16x32xf32, #tpu.memory_space<vmem>>, vector<4x32xf32>
    %9 = arith.subf %8, %0 : vector<4x32xf32>
    %10 = arith.mulf %9, %9 : vector<4x32xf32>
    %11 = arith.addf %7, %10 : vector<4x32xf32>
    %c3 = arith.constant 3 : index
    %c0_5 = arith.constant 0 : index
    %12 = tpu.strided_load %arg1[%c3, %c0_5] {strides = array<i32: 4, 1>} : memref<16x32xf32, #tpu.memory_space<vmem>>, vector<4x32xf32>
    %13 = arith.subf %12, %0 : vector<4x32xf32>
    %14 = arith.mulf %13, %13 : vector<4x32xf32>
    %15 = arith.addf %11, %14 : vector<4x32xf32>
    %cst = arith.constant dense<0.000000e+00> : vector<32xf32>
    %16 = vector.multi_reduction <add>, %15, %cst [0] : vector<4x32xf32> to vector<32xf32>
    %17 = vector.shape_cast %16 : vector<32xf32> to vector<1x1x32xf32>
    %c0_6 = arith.constant 0 : index
    %c0_7 = arith.constant 0 : index
    %c0_8 = arith.constant 0 : index
    %18 = vector.load %arg3[%c0_6, %c0_7, %c0_8] : memref<1x1x32xf32, #tpu.memory_space<vmem>>, vector<1x1x32xf32>
    tpu.vector_store %arg3[%c0_6, %c0_7, %c0_8], %17 {strides = array<i32>} : memref<1x1x32xf32, #tpu.memory_space<vmem>>, vector<1x1x32xf32>,
    return
  }
  func.func @transform_0(%arg0: i32) -> (i32, i32) {
    %c0_i32 = arith.constant 0 : i32
    %c0_i32_0 = arith.constant 0 : i32
    return %arg0, %c0_i32 : i32, i32
  }
  func.func @transform_1(%arg0: i32) -> (i32, i32) {
    %c0_i32 = arith.constant 0 : i32
    %c0_i32_0 = arith.constant 0 : i32
    return %arg0, %c0_i32 : i32, i32
  }
  func.func @transform_2(%arg0: i32) -> (i32, i32, i32) {
    %c0_i32 = arith.constant 0 : i32
    %c0_i32_0 = arith.constant 0 : i32
    %c0_i32_1 = arith.constant 0 : i32
    return %arg0, %c0_i32, %c0_i32_0 : i32, i32, i32
  }
}

</mosaic_0001>

<llo_original>
// kernel: reasoning_loss.1
$region0: #{reasoning_loss.1}
  #allocation0 [shape = 'u32[]', space=smem, size = 0x4, offset = 0x4, fixed_abs, tag = 'smem constant byte address 0x4 - core index']
  #allocation1 [shape = 'u32[72,128]{1,0:T(1,128)}', space=vmem, size = 0x9000, scoped, tag = 'internal scratch']
  %s0 = inlined_call_operand.hbm [shape: f32[16,32], index: 0, kind: input, shape index: {}]
  %s1 = inlined_call_operand.vmem [shape: f32[4,32], index: 1, kind: input, shape index: {}]
  %s2 = inlined_call_operand.vmem [shape: f32[1,1,32], index: 2, kind: output, shape index: {}]
  %s3 = sld [smem:[#allocation0]]
  $region22: #{reasoning_loss.1} parent=0
    _
  %s5 = ssub.s32 1, %s3
  %s6 = scalar_select 0, %s5, %s3
  $region1: #{reasoning_loss.1} parent=0
    #allocation2 [shape = 'u8[8192]{0}', space=vmem, size = 0x2000, scoped, tag = 'input window, operand 0, single buffered']
    #allocation3 [shape = 's32[1]{0}', space=sflag, size = 0x4, scoped, tag = 'scoped memory for reasoning_loss.1']
    %7 = vsyncpa [#allocation3], 0
    // Predicated region
    $region2: #{reasoning_loss.1} parent=1 // pred_check
      _
    $region3: #{reasoning_loss.1} parent=1 // pred_check_branch
      %9 = sbr.rel (0) target = $region5
    $region4: #{reasoning_loss.1} parent=1 // pred_region
      %11 = vsyncadd [#allocation3], 0
      %s12 = sshll.u32 %s0, 4
      %s13 = int_to_ptr.hbm [resolvable:$true] %s12
      %s14 = sshll.u32 [#allocation2], 4
      %s15 = int_to_ptr.vmem [resolvable:$true] %s14
      %20 = dma.hbm_to_vmem [thread:$0]  %s13, 256, %s15, [#allocation3], 128, 128, 8
    $region5: #{reasoning_loss.1} parent=1 // pred_fallthru
      _
    // Predicated region
    $region6: #{reasoning_loss.1} parent=1 // pred_check
      _
    $region7: #{reasoning_loss.1} parent=1 // pred_check_branch
      %22 = sbr.rel (0) target = $region9
    $region8: #{reasoning_loss.1} parent=1 // pred_region
      _
    $region9: #{reasoning_loss.1} parent=1 // pred_fallthru
      _
    // Predicated region
    $region10: #{reasoning_loss.1} parent=1 // pred_check
      _
    $region11: #{reasoning_loss.1} parent=1 // pred_check_branch
      %24 = sbr.rel (0) target = $region13
    $region12: #{reasoning_loss.1} parent=1 // pred_region
      %26 = dma.done [#allocation3], 256
    $region13: #{reasoning_loss.1} parent=1 // pred_fallthru
      _
    %v27 = vld [vmem:[%s1] sm:$0xf]
    %v28 = vld [vmem:[#allocation2] ss:$4 sm:$0xf]
    %v29 = vsub.f32 %v28, %v27
    %v30 = vmul.f32 %v29, %v29
    %s31 = scalar_lea.vmem [#allocation2], 1
    %v32 = vld [vmem:[%s31] ss:$4 sm:$0xf]
    %v33 = vsub.f32 %v32, %v27
    %v34 = vmul.f32 %v33, %v33
    %v35 = vadd.f32 %v30, %v34
    %s36 = scalar_lea.vmem [#allocation2], 2
    %v37 = vld [vmem:[%s36] ss:$4 sm:$0xf]
    %v38 = vsub.f32 %v37, %v27
    %v39 = vmul.f32 %v38, %v38
    %v40 = vadd.f32 %v35, %v39
    %s41 = scalar_lea.vmem [#allocation2], 3
    %v42 = vld [vmem:[%s41] ss:$4 sm:$0xf]
    %v43 = vsub.f32 %v42, %v27
    %v44 = vmul.f32 %v43, %v43
    %v45 = vadd.f32 %v40, %v44
    %vm46 = vcmask 257024
    %v47 = vsel %vm46, %v45, 0.0
    %v48 = vrot.slane %v47, 4
    %v49 = vadd.f32 %v47, %v48
    %v50 = vrot.slane %v49, 2
    %v51 = vadd.f32 %v49, %v50
    %v52 = vrot.slane %v51, 1
    %v53 = vadd.f32 %v51, %v52
    %vm54 = vcmask 253952
    %55 = vst.msk [vmem:[%s2] sm:$0x1] %vm54, %v53
    // Predicated region
    $region14: #{reasoning_loss.1} parent=1 // pred_check
      _
    $region15: #{reasoning_loss.1} parent=1 // pred_check_branch
      %57 = sbr.rel (0) target = $region17
    $region16: #{reasoning_loss.1} parent=1 // pred_region
      _
    $region17: #{reasoning_loss.1} parent=1 // pred_fallthru
      _
    // Predicated region
    $region18: #{reasoning_loss.1} parent=1 // pred_check
      _
    $region19: #{reasoning_loss.1} parent=1 // pred_check_branch
      %59 = sbr.rel (0) target = $region21
    $region20: #{reasoning_loss.1} parent=1 // pred_region
      _
    $region21: #{reasoning_loss.1} parent=1 // pred_fallthru
      _
    %60 = vsyncpa [#allocation3], 1

</llo_original>
